<compile_context>
chip_gen: v7x
topology: tpu7x:2x2x1
jax: 0.10.0
libtpu: 0.0.40
codegen_flags: <defaults>
</compile_context>

<pallas_src>
import math
import functools

import jax
import jax.numpy as jnp
from jax import lax
from jax.experimental import pallas as pl
from jax.experimental.pallas import tpu as pltpu


_VMEM_LIMIT = 64 * 1024 * 1024          # explicit cap; <= v7x physical, > v5e/v6e defaults
_WEIGHT_BLOCK_BUDGET = 4 * 1024 * 1024  # per-buffer cap for the resident weight slice


def _sublane(dtype):
    """Packed-dtype sublane granularity: 8 rows for 4-byte, 16 for 2-byte, 32 for 1-byte."""
    return {4: 8, 2: 16, 1: 32}.get(jnp.dtype(dtype).itemsize, 8)


def _pick_tile(dim, target, granule=8):
    """Largest tile <= target that divides `dim` and is a multiple of `granule`,
    falling back to the full dimension (always a legal block extent)."""
    if dim <= target:
        return dim
    t = (target // granule) * granule
    while t >= granule:
        if dim % t == 0:
            return t
        t -= granule
    return dim  # TODO(synk): pad awkward dims instead of one full (possibly huge) block


def _pick_head_group(n_head, d_model, d_k, itemsize, budget=_WEIGHT_BLOCK_BUDGET):
    """Largest divisor of n_head whose (hg, D, d_k) weight slice fits the VMEM budget."""
    for hg in range(n_head, 0, -1):
        if n_head % hg == 0 and hg * d_model * d_k * itemsize <= budget:
            return hg
    return 1


# --------------------------------------------------------------------------------------
# 1) fused projection + head split:  out[b, h, l, :] = x[b, l, :] @ W_h
#    grid (B, head-group, row-tile); the (hg, D, d_k) weight slice stays resident across
#    the innermost row-tile axis, x rows are streamed.
# --------------------------------------------------------------------------------------
def _proj_heads_kernel(x_ref, w_ref, o_ref):
    # x_ref: (tm, D), w_ref: (hg, D, d_k), o_ref: (hg, tm, d_k)
    x = x_ref[...]
    hg = o_ref.shape[0]
    # Per-head dots keep everything relayout-free (output lane dim == full d_k).
    # TODO(synk): a d_k<128-wide dot underfills the MXU; acceptable here (projections are
    # a minority of total FLOPs), revisit with a wide-N + relayout variant if needed.
    for g in range(hg):
        o_ref[g] = jnp.dot(x, w_ref[g],
                           preferred_element_type=jnp.float32).astype(o_ref.dtype)


def _project_heads(x, w_heads, *, row_tile=512):
    """x: (B, L, D); w_heads: (n_head, D, d_k).  Returns (B, n_head, L, d_k)."""
    B, L, D = x.shape
    H, _, d_k = w_heads.shape
    tm = _pick_tile(L, row_tile, _sublane(x.dtype))
    hg = _pick_head_group(H, D, d_k, jnp.dtype(w_heads.dtype).itemsize)
    # TODO(synk): also tile K (with an f32 accumulator + arbitrary K axis) for very large D.
    return pl.pallas_call(
        _proj_heads_kernel,
        out_shape=jax.ShapeDtypeStruct((B, H, L, d_k), x.dtype),
        grid_spec=pltpu.PrefetchScalarGridSpec(
            num_scalar_prefetch=0,
            grid=(B, H // hg, L // tm),          # row tiles innermost -> weight resident
            in_specs=[
                pl.BlockSpec((None, tm, D), lambda b, g, i: (b, i, 0)),
                pl.BlockSpec((hg, D, d_k), lambda b, g, i: (g, 0, 0)),
            ],
            out_specs=pl.BlockSpec((None, hg, tm, d_k), lambda b, g, i: (b, g, i, 0)),
        ),
        compiler_params=pltpu.CompilerParams(
            dimension_semantics=("parallel", "parallel", "parallel"),
            vmem_limit_bytes=_VMEM_LIMIT),
    )(x, w_heads)


# --------------------------------------------------------------------------------------
# 2) flash-style attention: grid (B, H, q-tile, k-tile), online softmax.
#    Scale is pre-folded into the query projection; the row-sum rides on the MXU.
#    Also emits per-row LSE (m + log l) so top_attn can be recomputed tile-by-tile.
# --------------------------------------------------------------------------------------
def _flash_kernel(q_ref, k_ref, v_ref, o_ref, lse_ref, m_sc, l_sc, acc_sc):
    ki = pl.program_id(3)

    @pl.when(ki == 0)
    def _init():
        m_sc[...] = jnp.full(m_sc.shape, -jnp.inf, dtype=m_sc.dtype)
        l_sc[...] = jnp.zeros(l_sc.shape, dtype=l_sc.dtype)
        acc_sc[...] = jnp.zeros(acc_sc.shape, dtype=acc_sc.dtype)

    q = q_ref[...]                       # (tq, d_k) native dtype, already scaled
    k = k_ref[...]                       # (tk, d_k)
    v = v_ref[...]                       # (tk, d_k)

    # q @ k^T via contracting dims (no explicit transpose / relayout); f32 accumulation.
    s = lax.dot_general(q, k, (((1,), (1,)), ((), ())),
                        preferred_element_type=jnp.float32)          # (tq, tk)

    m_prev = m_sc[...]
    m_new = jnp.maximum(m_prev, jnp.max(s, axis=-1, keepdims=True))  # XLU (only reduce left)
    alpha = jnp.exp(m_prev - m_new)                                  # EUP
    p = jnp.exp(s - m_new)                                           # EUP

    p_lo = p.astype(v.dtype)
    # Row-sum on the MXU (idle lanes at d_k <= 128) instead of a second XLU reduction.
    ones_col = jnp.ones((p_lo.shape[1], 1), dtype=v.dtype)
    p_sum = jnp.dot(p_lo, ones_col, preferred_element_type=jnp.float32)

    l_sc[...] = alpha * l_sc[...] + p_sum
    acc_sc[...] = alpha * acc_sc[...] + jnp.dot(
        p_lo, v, preferred_element_type=jnp.float32)
    m_sc[...] = m_new

    @pl.when(ki == pl.num_programs(3) - 1)
    def _finalize():
        l = l_sc[...]
        inv_l = pl.reciprocal(l, approx=True)          # EUP slot, effectively free
        o_ref[...] = (acc_sc[...] * inv_l).astype(o_ref.dtype)
        lse_ref[...] = m_sc[...] + jnp.log(l)


# --------------------------------------------------------------------------------------
# 3) head-0 attention probabilities (module's `top_attn`), k-tiled, exact softmax via the
#    flash kernel's LSE:  attn = exp(q·k^T - lse).  No reductions, no approx reciprocal.
# --------------------------------------------------------------------------------------
def _top_attn_kernel(q_ref, k_ref, lse_ref, attn_ref):
    s = lax.dot_general(q_ref[...], k_ref[...], (((1,), (1,)), ((), ())),
                        preferred_element_type=jnp.float32)          # (tqa, tka)
    attn_ref[...] = jnp.exp(s - lse_ref[...]).astype(attn_ref.dtype)


# --------------------------------------------------------------------------------------
# 4) residual + ONMT LayerNorm (unbiased std, eps added to sigma)
# --------------------------------------------------------------------------------------
def _res_ln_kernel(ctx_ref, resid_ref, g_ref, b_ref, o_ref, *, eps):
    x = ctx_ref[...].astype(jnp.float32) + resid_ref[...].astype(jnp.float32)
    d = x.shape[-1]
    mu = jnp.mean(x, axis=-1, keepdims=True)
    xc = x - mu
    var = jnp.sum(xc * xc, axis=-1, keepdims=True) * (1.0 / (d - 1))   # unbiased
    sigma = jnp.sqrt(var)
    ln = xc * pl.reciprocal(sigma + eps, approx=False)                 # eps on sigma
    o_ref[...] = (ln * g_ref[...].astype(jnp.float32)
                  + b_ref[...].astype(jnp.float32)).astype(o_ref.dtype)


# --------------------------------------------------------------------------------------
# wrapper
# --------------------------------------------------------------------------------------
def multi_headed_attention(key, value, query, wk, wv, wq, gain, bias,
                           *, n_head, eps=1e-3, mask=None, return_attn=True,
                           q_tile=512, k_tile=512,
                           attn_q_tile=256, attn_k_tile=512,
                           proj_row_tile=512, ln_row_tile=256):
    """key/value/query: (B, L, D).  wk/wv/wq: (D, D) stored transposed so x @ W matches
    nn.Linear(bias=False).  gain/bias: (1, D).
    Returns (ret (B, Lq, D), top_attn (B, Lq, Lk) or None if return_attn=False)."""
    if mask is not None:
        raise NotImplementedError("mask path not implemented")  # TODO(synk): masked_fill

    B, Lk, D = key.shape
    _, Lq, _ = query.shape
    assert D % n_head == 0
    d_k = D // n_head
    scale = 1.0 / math.sqrt(d_k)

    # Fold the 1/sqrt(d_k) score scale into the query weight (one-time, exact up to f32
    # rounding) so the flash inner loop has no per-step (tq, tk) multiply.
    wq_scaled = (wq.astype(jnp.float32) * scale).astype(wq.dtype)

    # (D, D) -> (n_head, D, d_k).  One-time tiny weight transpose; in a real model the
    # weights would be stored in this layout.
    def _to_head_weights(w):
        return w.reshape(D, n_head, d_k).transpose(1, 0, 2)

    # ---- Q/K/V projections fused with the head split (head-major output, no _to_heads) ----
    k4 = _project_heads(key, _to_head_weights(wk), row_tile=proj_row_tile)
    v4 = _project_heads(value, _to_head_weights(wv), row_tile=proj_row_tile)
    q4 = _project_heads(query, _to_head_weights(wq_scaled), row_tile=proj_row_tile)

    sub = _sublane(q4.dtype)
    tq = _pick_tile(Lq, q_tile, sub)
    tk = _pick_tile(Lk, k_tile, sub)

    # v7x item: when d_k is lane-aligned (multiple of 128) the context can be written
    # directly into a (B, Lq, D) slab, removing the ctx transpose entirely.
    write_ctx_flat = (d_k % 128 == 0)
    if write_ctx_flat:
        ctx_shape = (B, Lq, D)
        ctx_spec = pl.BlockSpec((None, tq, d_k), lambda b, h, qi, ki: (b, qi, h))
    else:
        ctx_shape = (B, n_head, Lq, d_k)
        ctx_spec = pl.BlockSpec((None, None, tq, d_k), lambda b, h, qi, ki: (b, h, qi, 0))

    # ---- flash attention over (batch, head, q-tile, k-tile) ----
    ctx, lse = pl.pallas_call(
        _flash_kernel,
        out_shape=(jax.ShapeDtypeStruct(ctx_shape, q4.dtype),
                   jax.ShapeDtypeStruct((B, n_head, Lq, 1), jnp.float32)),
        grid_spec=pltpu.PrefetchScalarGridSpec(
            num_scalar_prefetch=0,
            grid=(B, n_head, Lq // tq, Lk // tk),
            in_specs=[
                pl.BlockSpec((None, None, tq, d_k), lambda b, h, qi, ki: (b, h, qi, 0)),
                pl.BlockSpec((None, None, tk, d_k), lambda b, h, qi, ki: (b, h, ki, 0)),
                pl.BlockSpec((None, None, tk, d_k), lambda b, h, qi, ki: (b, h, ki, 0)),
            ],
            out_specs=(ctx_spec,
                       pl.BlockSpec((None, None, tq, 1),
                                    lambda b, h, qi, ki: (b, h, qi, 0))),
            scratch_shapes=[
                pltpu.VMEM((tq, 1), jnp.float32),     # running max
                pltpu.VMEM((tq, 1), jnp.float32),     # running denominator
                pltpu.VMEM((tq, d_k), jnp.float32),   # running context accumulator
            ],
        ),
        compiler_params=pltpu.CompilerParams(
            dimension_semantics=("parallel", "parallel", "parallel", "arbitrary"),
            vmem_limit_bytes=_VMEM_LIMIT),
    )(q4, k4, v4)

    # ---- top_attn (optional): head-0 probabilities, k-tiled, exact via LSE ----
    top_attn = None
    if return_attn:
        tqa = _pick_tile(Lq, attn_q_tile, sub)
        tka = _pick_tile(Lk, attn_k_tile, 128)   # lane-dim tile: multiple of 128 or full Lk
        top_attn = pl.pallas_call(
            _top_attn_kernel,
            out_shape=jax.ShapeDtypeStruct((B, Lq, Lk), query.dtype),
            grid_spec=pltpu.PrefetchScalarGridSpec(
                num_scalar_prefetch=0,
                grid=(B, Lq // tqa, Lk // tka),
                in_specs=[
                    pl.BlockSpec((None, None, tqa, d_k), lambda b, qi, ki: (b, 0, qi, 0)),
                    pl.BlockSpec((None, None, tka, d_k), lambda b, qi, ki: (b, 0, ki, 0)),
                    pl.BlockSpec((None, None, tqa, 1), lambda b, qi, ki: (b, 0, qi, 0)),
                ],
                out_specs=pl.BlockSpec((None, tqa, tka), lambda b, qi, ki: (b, qi, ki)),
            ),
            compiler_params=pltpu.CompilerParams(
                dimension_semantics=("parallel", "parallel", "parallel"),
                vmem_limit_bytes=_VMEM_LIMIT),
        )(q4, k4, lse)

    # ---- residual + ONMT LayerNorm over full d_model rows ----
    if write_ctx_flat:
        ctx2d = ctx.reshape(B * Lq, D)                       # free reshape, no transpose
    else:
        ctx2d = ctx.transpose(0, 2, 1, 3).reshape(B * Lq, D)  # only remaining transpose
    resid2d = query.reshape(B * Lq, D)
    tr = _pick_tile(B * Lq, ln_row_tile, _sublane(query.dtype))
    out2d = pl.pallas_call(
        functools.partial(_res_ln_kernel, eps=eps),
        out_shape=jax.ShapeDtypeStruct((B * Lq, D), query.dtype),
        grid_spec=pltpu.PrefetchScalarGridSpec(
            num_scalar_prefetch=0,
            grid=((B * Lq) // tr,),
            in_specs=[
                pl.BlockSpec((tr, D), lambda i: (i, 0)),
                pl.BlockSpec((tr, D), lambda i: (i, 0)),
                pl.BlockSpec((1, D), lambda i: (0, 0)),
                pl.BlockSpec((1, D), lambda i: (0, 0)),
            ],
            out_specs=pl.BlockSpec((tr, D), lambda i: (i, 0)),
        ),
        compiler_params=pltpu.CompilerParams(
            dimension_semantics=("parallel",),
            vmem_limit_bytes=_VMEM_LIMIT),
    )(ctx2d, resid2d, gain, bias)

    return out2d.reshape(B, Lq, D), top_attn


if __name__ == "__main__":
    # Small shapes consistent with the module: batch=2, seq=8, d_model=32, heads=4.
    B, L, D, H = 2, 8, 32, 4

    root = jax.random.PRNGKey(0)
    ks = jax.random.split(root, 8)

    key = jax.random.normal(ks[0], (B, L, D), dtype=jnp.float32)
    value = jax.random.normal(ks[1], (B, L, D), dtype=jnp.float32)
    query = jax.random.normal(ks[2], (B, L, D), dtype=jnp.float32)

    # nn.Linear(d_model, d_model, bias=False) weights, stored transposed (in, out).
    lin_scale = 1.0 / math.sqrt(D)
    wk = jax.random.uniform(ks[3], (D, D), jnp.float32, -lin_scale, lin_scale)
    wv = jax.random.uniform(ks[4], (D, D), jnp.float32, -lin_scale, lin_scale)
    wq = jax.random.uniform(ks[5], (D, D), jnp.float32, -lin_scale, lin_scale)

    # BottleLayerNorm params: a_2 = ones, b_2 = zeros.
    gain = jnp.ones((1, D), dtype=jnp.float32)
    bias = jnp.zeros((1, D), dtype=jnp.float32)

    ret, top_attn = multi_headed_attention(
        key, value, query, wk, wv, wq, gain, bias, n_head=H)
    jax.block_until_ready((ret, top_attn))

    assert ret.shape == (B, L, D)
    assert top_attn.shape == (B, L, L)
    print("KERNEL_OK")
</pallas_src>

<mosaic_0001>
module attributes {stable_mosaic.version = 11 : i64} {
  func.func @_proj_heads_kernel(%arg0: i32, %arg1: i32, %arg2: i32, %arg3: memref<1x8x32xf32, #tpu.memory_space<vmem>>, %arg4: memref<4x32x8xf32, #tpu.memory_space<vmem>>, %arg5: memref<1x4x8x8xf32, #tpu.memory_space<vmem>>) attributes {dimension_semantics = [#tpu.dimension_semantics<parallel>, #tpu.dimension_semantics<parallel>, #tpu.dimension_semantics<parallel>], iteration_bounds = array<i64: 2, 1, 1>, scalar_prefetch = 0 : i64, scratch_operands = 0 : i64, tpu.core_type = #tpu.core_type<tc>, window_params = [{transform_indices = @transform_0, window_bounds = array<i64: 1, 8, 32>}, {transform_indices = @transform_1, window_bounds = array<i64: 4, 32, 8>}, {transform_indices = @transform_2, window_bounds = array<i64: 1, 4, 8, 8>}]} {
    %c0 = arith.constant 0 : index
    %c0_0 = arith.constant 0 : index
    %c0_1 = arith.constant 0 : index
    %0 = vector.load %arg3[%c0, %c0_0, %c0_1] : memref<1x8x32xf32, #tpu.memory_space<vmem>>, vector<1x8x32xf32>
    %1 = vector.shape_cast %0 : vector<1x8x32xf32> to vector<8x32xf32>
    %c0_2 = arith.constant 0 : index
    %c0_3 = arith.constant 0 : index
    %c0_4 = arith.constant 0 : index
    %2 = vector.load %arg4[%c0_2, %c0_3, %c0_4] : memref<4x32x8xf32, #tpu.memory_space<vmem>>, vector<1x32x8xf32>
    %3 = vector.shape_cast %2 : vector<1x32x8xf32> to vector<32x8xf32>
    %cst = arith.constant dense<0.000000e+00> : vector<8x8xf32>
    %4 = tpu.matmul %1, %3, %cst {dimension_numbers = #tpu.dot_dimension_numbers<[1], [0], [0], [1], [0, 0, 1, 1], [], []>} : vector<8x32xf32>, vector<32x8xf32>, vector<8x8xf32> -> vector<8x8xf32>
    %c0_5 = arith.constant 0 : index
    %c0_6 = arith.constant 0 : index
    %c0_7 = arith.constant 0 : index
    %c0_8 = arith.constant 0 : index
    %5 = vector.load %arg5[%c0_5, %c0_6, %c0_7, %c0_8] : memref<1x4x8x8xf32, #tpu.memory_space<vmem>>, vector<1x1x8x8xf32>
    %6 = vector.shape_cast %5 : vector<1x1x8x8xf32> to vector<8x8xf32>
    %7 = vector.shape_cast %4 : vector<8x8xf32> to vector<1x1x8x8xf32>
    tpu.vector_store %arg5[%c0_5, %c0_6, %c0_7, %c0_8], %7 {strides = array<i32>} : memref<1x4x8x8xf32, #tpu.memory_space<vmem>>, vector<1x1x8x8xf32>,
    %c1 = arith.constant 1 : index
    %c0_9 = arith.constant 0 : index
    %c0_10 = arith.constant 0 : index
    %8 = vector.load %arg4[%c1, %c0_9, %c0_10] : memref<4x32x8xf32, #tpu.memory_space<vmem>>, vector<1x32x8xf32>
    %9 = vector.shape_cast %8 : vector<1x32x8xf32> to vector<32x8xf32>
    %cst_11 = arith.constant dense<0.000000e+00> : vector<8x8xf32>
    %10 = tpu.matmul %1, %9, %cst_11 {dimension_numbers = #tpu.dot_dimension_numbers<[1], [0], [0], [1], [0, 0, 1, 1], [], []>} : vector<8x32xf32>, vector<32x8xf32>, vector<8x8xf32> -> vector<8x8xf32>
    %c0_12 = arith.constant 0 : index
    %c1_13 = arith.constant 1 : index
    %c0_14 = arith.constant 0 : index
    %c0_15 = arith.constant 0 : index
    %11 = vector.load %arg5[%c0_12, %c1_13, %c0_14, %c0_15] : memref<1x4x8x8xf32, #tpu.memory_space<vmem>>, vector<1x1x8x8xf32>
    %12 = vector.shape_cast %11 : vector<1x1x8x8xf32> to vector<8x8xf32>
    %13 = vector.shape_cast %10 : vector<8x8xf32> to vector<1x1x8x8xf32>
    tpu.vector_store %arg5[%c0_12, %c1_13, %c0_14, %c0_15], %13 {strides = array<i32>} : memref<1x4x8x8xf32, #tpu.memory_space<vmem>>, vector<1x1x8x8xf32>,
    %c2 = arith.constant 2 : index
    %c0_16 = arith.constant 0 : index
    %c0_17 = arith.constant 0 : index
    %14 = vector.load %arg4[%c2, %c0_16, %c0_17] : memref<4x32x8xf32, #tpu.memory_space<vmem>>, vector<1x32x8xf32>
    %15 = vector.shape_cast %14 : vector<1x32x8xf32> to vector<32x8xf32>
    %cst_18 = arith.constant dense<0.000000e+00> : vector<8x8xf32>
    %16 = tpu.matmul %1, %15, %cst_18 {dimension_numbers = #tpu.dot_dimension_numbers<[1], [0], [0], [1], [0, 0, 1, 1], [], []>} : vector<8x32xf32>, vector<32x8xf32>, vector<8x8xf32> -> vector<8x8xf32>
    %c0_19 = arith.constant 0 : index
    %c2_20 = arith.constant 2 : index
    %c0_21 = arith.constant 0 : index
    %c0_22 = arith.constant 0 : index
    %17 = vector.load %arg5[%c0_19, %c2_20, %c0_21, %c0_22] : memref<1x4x8x8xf32, #tpu.memory_space<vmem>>, vector<1x1x8x8xf32>
    %18 = vector.shape_cast %17 : vector<1x1x8x8xf32> to vector<8x8xf32>
    %19 = vector.shape_cast %16 : vector<8x8xf32> to vector<1x1x8x8xf32>
    tpu.vector_store %arg5[%c0_19, %c2_20, %c0_21, %c0_22], %19 {strides = array<i32>} : memref<1x4x8x8xf32, #tpu.memory_space<vmem>>, vector<1x1x8x8xf32>,
    %c3 = arith.constant 3 : index
    %c0_23 = arith.constant 0 : index
    %c0_24 = arith.constant 0 : index
    %20 = vector.load %arg4[%c3, %c0_23, %c0_24] : memref<4x32x8xf32, #tpu.memory_space<vmem>>, vector<1x32x8xf32>
    %21 = vector.shape_cast %20 : vector<1x32x8xf32> to vector<32x8xf32>
    %cst_25 = arith.constant dense<0.000000e+00> : vector<8x8xf32>
    %22 = tpu.matmul %1, %21, %cst_25 {dimension_numbers = #tpu.dot_dimension_numbers<[1], [0], [0], [1], [0, 0, 1, 1], [], []>} : vector<8x32xf32>, vector<32x8xf32>, vector<8x8xf32> -> vector<8x8xf32>
    %c0_26 = arith.constant 0 : index
    %c3_27 = arith.constant 3 : index
    %c0_28 = arith.constant 0 : index
    %c0_29 = arith.constant 0 : index
    %23 = vector.load %arg5[%c0_26, %c3_27, %c0_28, %c0_29] : memref<1x4x8x8xf32, #tpu.memory_space<vmem>>, vector<1x1x8x8xf32>
    %24 = vector.shape_cast %23 : vector<1x1x8x8xf32> to vector<8x8xf32>
    %25 = vector.shape_cast %22 : vector<8x8xf32> to vector<1x1x8x8xf32>
    tpu.vector_store %arg5[%c0_26, %c3_27, %c0_28, %c0_29], %25 {strides = array<i32>} : memref<1x4x8x8xf32, #tpu.memory_space<vmem>>, vector<1x1x8x8xf32>,
    return
  }
  func.func @transform_0(%arg0: i32, %arg1: i32, %arg2: i32) -> (i32, i32, i32) {
    %c0_i32 = arith.constant 0 : i32
    %c0_i32_0 = arith.constant 0 : i32
    return %arg0, %arg2, %c0_i32 : i32, i32, i32
  }
  func.func @transform_1(%arg0: i32, %arg1: i32, %arg2: i32) -> (i32, i32, i32) {
    %c0_i32 = arith.constant 0 : i32
    %c0_i32_0 = arith.constant 0 : i32
    %c0_i32_1 = arith.constant 0 : i32
    return %arg1, %c0_i32, %c0_i32_0 : i32, i32, i32
  }
  func.func @transform_2(%arg0: i32, %arg1: i32, %arg2: i32) -> (i32, i32, i32, i32) {
    %c0_i32 = arith.constant 0 : i32
    %c0_i32_0 = arith.constant 0 : i32
    return %arg0, %arg1, %arg2, %c0_i32 : i32, i32, i32, i32
  }
}

</mosaic_0001>

<llo_original>
// kernel: tpu_custom_call.1
$region0: #{tpu_custom_call.1}
  #allocation0 [shape = 'u32[]', space=smem, size = 0x4, offset = 0x4, fixed_abs, tag = 'smem constant byte address 0x4 - core index']
  #allocation1 [shape = 'u32[144,128]{1,0:T(1,128)}', space=vmem, size = 0x12000, scoped, tag = 'internal scratch']
  %s0 = inlined_call_operand.hbm [shape: f32[2,8,32], index: 0, kind: input, shape index: {}]
  %s1 = inlined_call_operand.hbm [shape: f32[4,32,8], index: 1, kind: input, shape index: {}]
  %s2 = inlined_call_operand.hbm [shape: f32[2,4,8,8], index: 2, kind: output, shape index: {}]
  %s3 = sld [smem:[#allocation0]]
  $region49: #{tpu_custom_call.1} parent=0
    _
  %s5 = ssub.s32 1, %s3
  %s6 = scalar_select 0, %s5, %s3
  $region1: #{tpu_custom_call.1} parent=0
    #allocation2 [shape = 'u8[8192]{0}', space=vmem, size = 0x2000, scoped, tag = 'input window, operand 0']
    #allocation3 [shape = 's32[2]{0}', space=sflag, size = 0x8, scoped, tag = 'scoped memory for tpu_custom_call.1']
    #allocation4 [shape = 's32[2]{0}', space=sflag, size = 0x8, scoped, tag = 'scoped memory for tpu_custom_call.1']
    #allocation5 [shape = 'u8[65536]{0}', space=vmem, size = 0x10000, scoped, tag = 'input window, operand 1, single buffered']
    #allocation6 [shape = 's32[1]{0}', space=sflag, size = 0x4, scoped, tag = 'scoped memory for tpu_custom_call.1']
    #allocation7 [shape = 'u8[32768]{0}', space=vmem, size = 0x8000, scoped, tag = 'output window, operand 0']
    %7 = vsyncpa [#allocation3], 0
    %s8 = scalar_lea.sflag [#allocation3], 1
    %9 = vsyncpa %s8, 0
    %10 = vsyncpa [#allocation6], 0
    %11 = vsyncpa [#allocation4], 0
    %s12 = scalar_lea.sflag [#allocation4], 1
    %13 = vsyncpa %s12, 0
    loop: start=0, step=1, limit=4
    $region2: #{tpu_custom_call.1} parent=1 // loop_pre_header
      _
    $region3: #{tpu_custom_call.1} parent=1 // loop_header
      %s15 = sphi 0, %s19
      %p16 = scmp.ge.s32.totalorder %s15, 4
      %s22 = sphi 0, %s41
      %s23 = sphi 0, %s37
      %s24 = sphi 0, %s33
      %s25 = sphi 0, %s22
      %s26 = sphi 0, %s23
      %s27 = sphi 0, %s24
      %s28 = sphi 0, %s25
      %s29 = sphi 0, %s26
      %s30 = sphi 0, %s27
      %s46 = sphi 0, %s48
      %s49 = sphi 0, %s46
      %s50 = sphi 0, %s49
      %s66 = sphi 0, %s50
      %s72 = sphi 0, %s74
      %s75 = sphi 0, %s72
      %s76 = sphi 0, %s75
      %s92 = sphi 0, %s76
      %s102 = sphi 0, %s104
      %s105 = sphi 0, %s102
      %s106 = sphi 0, %s105
      %s122 = sphi 0, %s106
    $region4: #{tpu_custom_call.1} parent=1 // loop_header_branch
      %18 = sbr.rel (%p16) target = $region8
    $region5: #{tpu_custom_call.1} parent=1 // loop_body
      %s20 = ssub.s32 %s15, 1
      %s21 = ssub.s32 %s15, 2
      %s31 = sadd.s32 1, %s24
      %p32 = scmp.ge.s32.totalorder %s31, 1
      %s33 = scalar_select %p32, 0, %s31
      %s34 = sadd.s32 1, %s23
      %s35 = scalar_select %p32, %s34, %s23
      %p36 = scmp.ge.s32.totalorder %s35, 1
      %s37 = scalar_select %p36, 0, %s35
      %s38 = sadd.s32 1, %s22
      %s39 = scalar_select %p36, %s38, %s22
      %p40 = scmp.ge.s32.totalorder %s39, 2
      %s41 = scalar_select %p40, 0, %s39
      %s42 = ssub.s32 %s22, %s41
      %s43 = ssub.s32 %s24, %s33
      %s44 = sor.u32 %s42, %s43
      %p45 = scmp.eq.s32.totalorder %s44, 0
      %s47 = sadd.s32 %s46, 1
      %s48 = scalar_select %p45, %s46, %s47
      %p51 = pneg %p45
      %p52 = scmp.eq.s32.totalorder %s15, 1
      %p53 = por %p51, %p52
      %p54 = scmp.ne.s32.totalorder %s46, %s49
      %p55 = scmp.eq.s32.totalorder %s15, 0
      %p56 = por %p54, %p55
      %p57 = scmp.ne.s32.totalorder %s46, %s49
      %p58 = scmp.eq.s32.totalorder %s20, 1
      %p59 = por %p57, %p58
      %p60 = scmp.ne.s32.totalorder %s49, %s50
      %p61 = scmp.eq.s32.totalorder %s20, 0
      %p62 = por %p60, %p61
      %p63 = scmp.ne.s32.totalorder %s49, %s50
      %p64 = scmp.eq.s32.totalorder %s21, 1
      %p65 = por %p63, %p64
      %p67 = scmp.ne.s32.totalorder %s50, %s66
      %p68 = scmp.eq.s32.totalorder %s21, 0
      %p69 = por %p67, %p68
      %s70 = ssub.s32 %s23, %s37
      %p71 = scmp.eq.s32.totalorder %s70, 0
      %s73 = sadd.s32 %s72, 1
      %s74 = scalar_select %p71, %s72, %s73
      %p77 = pneg %p71
      %p78 = scmp.eq.s32.totalorder %s15, 1
      %p79 = por %p77, %p78
      %p80 = scmp.ne.s32.totalorder %s72, %s75
      %p81 = scmp.eq.s32.totalorder %s15, 0
      %p82 = por %p80, %p81
      %p83 = scmp.ne.s32.totalorder %s72, %s75
      %p84 = scmp.eq.s32.totalorder %s20, 1
      %p85 = por %p83, %p84
      %p86 = scmp.ne.s32.totalorder %s75, %s76
      %p87 = scmp.eq.s32.totalorder %s20, 0
      %p88 = por %p86, %p87
      %p89 = scmp.ne.s32.totalorder %s75, %s76
      %p90 = scmp.eq.s32.totalorder %s21, 1
      %p91 = por %p89, %p90
      %p93 = scmp.ne.s32.totalorder %s76, %s92
      %p94 = scmp.eq.s32.totalorder %s21, 0
      %p95 = por %p93, %p94
      %s96 = ssub.s32 %s22, %s41
      %s97 = ssub.s32 %s23, %s37
      %s98 = sor.u32 %s96, %s97
      %s99 = ssub.s32 %s24, %s33
      %s100 = sor.u32 %s98, %s99
      %p101 = scmp.eq.s32.totalorder %s100, 0
      %s103 = sadd.s32 %s102, 1
      %s104 = scalar_select %p101, %s102, %s103
      %p107 = pneg %p101
      %p108 = scmp.eq.s32.totalorder %s15, 1
      %p109 = por %p107, %p108
      %p110 = scmp.ne.s32.totalorder %s102, %s105
      %p111 = scmp.eq.s32.totalorder %s15, 0
      %p112 = por %p110, %p111
      %p113 = scmp.ne.s32.totalorder %s102, %s105
      %p114 = scmp.eq.s32.totalorder %s20, 1
      %p115 = por %p113, %p114
      %p116 = scmp.ne.s32.totalorder %s105, %s106
      %p117 = scmp.eq.s32.totalorder %s20, 0
      %p118 = por %p116, %p117
      %p119 = scmp.ne.s32.totalorder %s105, %s106
      %p120 = scmp.eq.s32.totalorder %s21, 1
      %p121 = por %p119, %p120
      %p123 = scmp.ne.s32.totalorder %s106, %s122
      %p124 = scmp.eq.s32.totalorder %s21, 0
      %p125 = por %p123, %p124
      %p126 = scmp.le.s32.totalorder 1, %s15
      %p127 = scmp.lt.s32.totalorder %s15, 3
      %p128 = pnand %p126, %p127
      %p129 = pneg %p128
      // Predicated region
      $region9: #{tpu_custom_call.1} parent=5 // pred_check
        _
      $region10: #{tpu_custom_call.1} parent=5 // pred_check_branch
        %131 = sbr.rel (%p128) target = $region12
      $region11: #{tpu_custom_call.1} parent=5 // pred_region
        %s132 = ssub.s32 %s15, 1
        // Predicated region
        $region13: #{tpu_custom_call.1} parent=11 // pred_check
          %p133 = pneg %p88
        $region14: #{tpu_custom_call.1} parent=11 // pred_check_branch
          %135 = sbr.rel (%p133) target = $region16
        $region15: #{tpu_custom_call.1} parent=11 // pred_region
          %s136 = smul.u32 4, %s26
          %s138 = ssub.s32 2048, 2048
          %139 = vsyncadd [#allocation6], %s138
          %s140 = smul.addr %s136, 4
          %s141 = smul.addr %s140, 128
          %s142 = scalar_lea.hbm %s1, %s141
          %s143 = sshll.u32 [#allocation5], 4
          %s144 = int_to_ptr.vmem [resolvable:$true] %s143
          %149 = dma.hbm_to_vmem [thread:$0]  %s142, 2048, %s144, [#allocation6], 128, 128, 8
        $region16: #{tpu_custom_call.1} parent=11 // pred_fallthru
          _
      $region12: #{tpu_custom_call.1} parent=5 // pred_fallthru
        _
      %p150 = scmp.lt.s32.totalorder %s15, 2
      // Predicated region
      $region17: #{tpu_custom_call.1} parent=5 // pred_check
        %p151 = pneg %p150
      $region18: #{tpu_custom_call.1} parent=5 // pred_check_branch
        %153 = sbr.rel (%p151) target = $region20
      $region19: #{tpu_custom_call.1} parent=5 // pred_region
        // Predicated region
        $region21: #{tpu_custom_call.1} parent=19 // pred_check
          %p154 = pneg %p56
        $region22: #{tpu_custom_call.1} parent=19 // pred_check_branch
          %156 = sbr.rel (%p154) target = $region24
        $region23: #{tpu_custom_call.1} parent=19 // pred_region
          %s157 = sand.u32 %s46, 1
          %s158 = scalar_lea.sflag [#allocation3], %s157
          %s159 = sand.u32 %s46, 1
          %s160 = smul.addr %s159, 8
          %s161 = scalar_lea.vmem [#allocation2], %s160
          %s163 = ssub.s32 128, 128
          %164 = vsyncadd %s158, %s163
          %s165 = sadd.s32 %s24, %s22
          %s166 = smul.addr %s165, 128
          %s167 = scalar_lea.hbm %s0, %s166
          %s169 = sshll.u32 %s161, 4
          %s170 = int_to_ptr.vmem [resolvable:$true] %s169
          %172 = dma.hbm_to_vmem [thread:$0]  %s167, 128, %s170, %s158
        $region24: #{tpu_custom_call.1} parent=19 // pred_fallthru
          _
      $region20: #{tpu_custom_call.1} parent=5 // pred_fallthru
        _
      %p173 = scmp.le.s32.totalorder 1, %s15
      %p174 = scmp.lt.s32.totalorder %s15, 3
      %p175 = pnand %p173, %p174
      %p176 = pneg %p175
      // Predicated region
      $region25: #{tpu_custom_call.1} parent=5 // pred_check
        _
      $region26: #{tpu_custom_call.1} parent=5 // pred_check_branch
        %178 = sbr.rel (%p175) target = $region28
      $region27: #{tpu_custom_call.1} parent=5 // pred_region
        %s179 = ssub.s32 %s15, 1
        %s180 = sand.u32 %s49, 1
        %s181 = scalar_lea.sflag [#allocation3], %s180
        %s182 = sand.u32 %s49, 1
        %s183 = smul.addr %s182, 8
        %s184 = scalar_lea.vmem [#allocation2], %s183
        // Predicated region
        $region29: #{tpu_custom_call.1} parent=27 // pred_check
          %p185 = pneg %p62
        $region30: #{tpu_custom_call.1} parent=27 // pred_check_branch
          %187 = sbr.rel (%p185) target = $region32
        $region31: #{tpu_custom_call.1} parent=27 // pred_region
          %188 = dma.done %s181, 128
        $region32: #{tpu_custom_call.1} parent=27 // pred_fallthru
          _
        // Predicated region
        $region33: #{tpu_custom_call.1} parent=27 // pred_check
          %p189 = pneg %p88
        $region34: #{tpu_custom_call.1} parent=27 // pred_check_branch
          %191 = sbr.rel (%p189) target = $region36
        $region35: #{tpu_custom_call.1} parent=27 // pred_region
          %192 = dma.done [#allocation6], 2048
        $region36: #{tpu_custom_call.1} parent=27 // pred_fallthru
          _
        %s193 = sand.u32 %s49, 1
        %s194 = scalar_lea.sflag [#allocation3], %s193
        %s195 = sand.u32 %s49, 1
        %s196 = smul.addr %s195, 8
        %s197 = scalar_lea.vmem [#allocation2], %s196
        %p198 = pneg %p62
        %p199 = pneg %p59
        %p200 = pneg %p88
        %p201 = pneg %p85
        %p202 = pneg %p118
        %p203 = pneg %p115
        %s204 = sand.u32 %s105, 1
        %s205 = scalar_lea.sflag [#allocation4], %s204
        %s206 = sand.u32 %s105, 1
        %s207 = smul.addr %s206, 32
        %s208 = scalar_lea.vmem [#allocation7], %s207
        %s209 = smul.u32 4, %s26
        %s210 = smul.u32 4, %s26
        %v211 = vld [vmem:[%s184] sm:$0xff]
        %v212 = vld [vmem:[#allocation5] sm:$0xff]
        %v213 = vld [vmem:[#allocation5 + $0x8] sm:$0xff]
        %v214 = vld [vmem:[#allocation5 + $0x10] sm:$0xff]
        %v215 = vld [vmem:[#allocation5 + $0x18] sm:$0xff]
        %vm216 = vcmask 261120
        %v218 = vsel %vm216, %v211, 0
        %220 = vmatprep.subr.mxu0 0.0
        %221 = vmatpush1.msra.mxu0 %v212
        %222 = vmatprep.subr.mxu0 0.0
        %223 = vmatpush1.msra.mxu0 %v213
        %224 = vmatprep.subr.mxu0 0.0
        %225 = vmatpush1.msra.mxu0 %v214
        %226 = vmatprep.subr.mxu0 0.0
        %227 = vmatpush1.msra.mxu0 %v215
        %228 = vmatprep.subr.mxu0 0.0
        %229 = vmatpush1.msra.mxu0 0.0
        %230 = vmatprep.subr.mxu0 0.0
        %231 = vmatpush1.msra.mxu0 0.0
        %232 = vmatprep.subr.mxu0 0.0
        %233 = vmatpush1.msra.mxu0 0.0
        %234 = vmatprep.subr.mxu0 0.0
        %235 = vmatpush1.msra.mxu0 0.0
        %236 = vmatprep.subr.mxu0 0.0
        %237 = vmatpush1.msra.mxu0 0.0
        %238 = vmatprep.subr.mxu0 0.0
        %239 = vmatpush1.msra.mxu0 0.0
        %240 = vmatprep.subr.mxu0 0.0
        %241 = vmatpush1.msra.mxu0 0.0
        %242 = vmatprep.subr.mxu0 0.0
        %243 = vmatpush1.msra.mxu0 0.0
        %244 = vmatprep.subr.mxu0 0.0
        %245 = vmatpush1.msra.mxu0 0.0
        %246 = vmatprep.subr.mxu0 0.0
        %247 = vmatpush1.msra.mxu0 0.0
        %248 = vmatprep.subr.mxu0 0.0
        %249 = vmatpush1.msra.mxu0 0.0
        %250 = vmatprep.subr.mxu0 0.0
        %251 = vmatpush1.msra.mxu0 0.0
        %252 = vmatprep.subr.mxu0 0.0
        %253 = vmatpush1.msra.mxu0 0.0
        %254 = vmatprep.subr.mxu0 0.0
        %255 = vmatpush1.msra.mxu0 0.0
        %256 = vmatprep.subr.mxu0 0.0
        %257 = vmatpush1.msra.mxu0 0.0
        %258 = vmatprep.subr.mxu0 0.0
        %259 = vmatpush1.msra.mxu0 0.0
        %260 = vmatprep.subr.mxu0 0.0
        %261 = vmatpush1.msra.mxu0 0.0
        %262 = vmatprep.subr.mxu0 0.0
        %263 = vmatpush1.msra.mxu0 0.0
        %264 = vmatprep.subr.mxu0 0.0
        %265 = vmatpush1.msra.mxu0 0.0
        %266 = vmatprep.subr.mxu0 0.0
        %267 = vmatpush1.msra.mxu0 0.0
        %268 = vmatprep.subr.mxu0 0.0
        %269 = vmatpush1.msra.mxu0 0.0
        %270 = vmatprep.subr.mxu0 0.0
        %271 = vmatpush1.msra.mxu0 0.0
        %272 = vmatprep.subr.mxu0 0.0
        %273 = vmatpush1.msra.mxu0 0.0
        %274 = vmatprep.subr.mxu0 0.0
        %275 = vmatpush1.msra.mxu0 0.0
        %276 = vmatprep.subr.mxu0 0.0
        %277 = vmatpush1.msra.mxu0 0.0
        %278 = vmatprep.subr.mxu0 0.0
        %279 = vmatpush1.msra.mxu0 0.0
        %280 = vmatprep.subr.mxu0 0.0
        %281 = vmatpush1.msra.mxu0 0.0
        %282 = vmatprep.subr.mxu0 0.0
        %283 = vmatpush1.msra.mxu0 0.0
        %284 = vmatprep.mubr.f32.mxu0 0.0
        %285 = vmatmul.mubr.f32.gmra.mrb[0].mxu0 %v218
        %v286 = vpop.f32.mrb[0].mxu0
        %v287 = vadd.f32 0.0, %v286
        %v288 = vpop.f32.mrb[0].mxu0
        %289 = vdwg.mxu0
        %vm290 = vcmask 64512
        %291 = vst.msk [vmem:[%s208] sm:$0xff] %vm290, %v287
        %s292 = scalar_lea.vmem [#allocation5], 32
        %v293 = vld [vmem:[%s292] sm:$0xff]
        %v294 = vld [vmem:[%s292 + $0x8] sm:$0xff]
        %v295 = vld [vmem:[%s292 + $0x10] sm:$0xff]
        %v296 = vld [vmem:[%s292 + $0x18] sm:$0xff]
        %297 = vmatprep.subr.mxu0 0.0
        %298 = vmatpush1.msra.mxu0 %v293
        %299 = vmatprep.subr.mxu0 0.0
        %300 = vmatpush1.msra.mxu0 %v294
        %301 = vmatprep.subr.mxu0 0.0
        %302 = vmatpush1.msra.mxu0 %v295
        %303 = vmatprep.subr.mxu0 0.0
        %304 = vmatpush1.msra.mxu0 %v296
        %305 = vmatprep.subr.mxu0 0.0
        %306 = vmatpush1.msra.mxu0 0.0
        %307 = vmatprep.subr.mxu0 0.0
        %308 = vmatpush1.msra.mxu0 0.0
        %309 = vmatprep.subr.mxu0 0.0
        %310 = vmatpush1.msra.mxu0 0.0
        %311 = vmatprep.subr.mxu0 0.0
        %312 = vmatpush1.msra.mxu0 0.0
        %313 = vmatprep.subr.mxu0 0.0
        %314 = vmatpush1.msra.mxu0 0.0
        %315 = vmatprep.subr.mxu0 0.0
        %316 = vmatpush1.msra.mxu0 0.0
        %317 = vmatprep.subr.mxu0 0.0
        %318 = vmatpush1.msra.mxu0 0.0
        %319 = vmatprep.subr.mxu0 0.0
        %320 = vmatpush1.msra.mxu0 0.0
        %321 = vmatprep.subr.mxu0 0.0
        %322 = vmatpush1.msra.mxu0 0.0
        %323 = vmatprep.subr.mxu0 0.0
        %324 = vmatpush1.msra.mxu0 0.0
        %325 = vmatprep.subr.mxu0 0.0
        %326 = vmatpush1.msra.mxu0 0.0
        %327 = vmatprep.subr.mxu0 0.0
        %328 = vmatpush1.msra.mxu0 0.0
        %329 = vmatprep.subr.mxu0 0.0
        %330 = vmatpush1.msra.mxu0 0.0
        %331 = vmatprep.subr.mxu0 0.0
        %332 = vmatpush1.msra.mxu0 0.0
        %333 = vmatprep.subr.mxu0 0.0
        %334 = vmatpush1.msra.mxu0 0.0
        %335 = vmatprep.subr.mxu0 0.0
        %336 = vmatpush1.msra.mxu0 0.0
        %337 = vmatprep.subr.mxu0 0.0
        %338 = vmatpush1.msra.mxu0 0.0
        %339 = vmatprep.subr.mxu0 0.0
        %340 = vmatpush1.msra.mxu0 0.0
        %341 = vmatprep.subr.mxu0 0.0
        %342 = vmatpush1.msra.mxu0 0.0
        %343 = vmatprep.subr.mxu0 0.0
        %344 = vmatpush1.msra.mxu0 0.0
        %345 = vmatprep.subr.mxu0 0.0
        %346 = vmatpush1.msra.mxu0 0.0
        %347 = vmatprep.subr.mxu0 0.0
        %348 = vmatpush1.msra.mxu0 0.0
        %349 = vmatprep.subr.mxu0 0.0
        %350 = vmatpush1.msra.mxu0 0.0
        %351 = vmatprep.subr.mxu0 0.0
        %352 = vmatpush1.msra.mxu0 0.0
        %353 = vmatprep.subr.mxu0 0.0
        %354 = vmatpush1.msra.mxu0 0.0
        %355 = vmatprep.subr.mxu0 0.0
        %356 = vmatpush1.msra.mxu0 0.0
        %357 = vmatprep.subr.mxu0 0.0
        %358 = vmatpush1.msra.mxu0 0.0
        %359 = vmatprep.subr.mxu0 0.0
        %360 = vmatpush1.msra.mxu0 0.0
        %361 = vmatprep.mubr.f32.mxu0 0.0
        %362 = vmatmul.mubr.f32.gmra.mrb[0].mxu0 %v218
        %v363 = vpop.f32.mrb[0].mxu0
        %v364 = vadd.f32 0.0, %v363
        %v365 = vpop.f32.mrb[0].mxu0
        %366 = vdwg.mxu0
        %s367 = scalar_lea.vmem %s208, 8 [#allocation7]
        %368 = vst.msk [vmem:[%s367] sm:$0xff] %vm290, %v364
        %s369 = scalar_lea.vmem [#allocation5], 64
        %v370 = vld [vmem:[%s369] sm:$0xff]
        %v371 = vld [vmem:[%s369 + $0x8] sm:$0xff]
        %v372 = vld [vmem:[%s369 + $0x10] sm:$0xff]
        %v373 = vld [vmem:[%s369 + $0x18] sm:$0xff]
        %374 = vmatprep.subr.mxu0 0.0
        %375 = vmatpush1.msra.mxu0 %v370
        %376 = vmatprep.subr.mxu0 0.0
        %377 = vmatpush1.msra.mxu0 %v371
        %378 = vmatprep.subr.mxu0 0.0
        %379 = vmatpush1.msra.mxu0 %v372
        %380 = vmatprep.subr.mxu0 0.0
        %381 = vmatpush1.msra.mxu0 %v373
        %382 = vmatprep.subr.mxu0 0.0
        %383 = vmatpush1.msra.mxu0 0.0
        %384 = vmatprep.subr.mxu0 0.0
        %385 = vmatpush1.msra.mxu0 0.0
        %386 = vmatprep.subr.mxu0 0.0
        %387 = vmatpush1.msra.mxu0 0.0
        %388 = vmatprep.subr.mxu0 0.0
        %389 = vmatpush1.msra.mxu0 0.0
        %390 = vmatprep.subr.mxu0 0.0
        %391 = vmatpush1.msra.mxu0 0.0
        %392 = vmatprep.subr.mxu0 0.0
        %393 = vmatpush1.msra.mxu0 0.0
        %394 = vmatprep.subr.mxu0 0.0
        %395 = vmatpush1.msra.mxu0 0.0
        %396 = vmatprep.subr.mxu0 0.0
        %397 = vmatpush1.msra.mxu0 0.0
        %398 = vmatprep.subr.mxu0 0.0
        %399 = vmatpush1.msra.mxu0 0.0
        %400 = vmatprep.subr.mxu0 0.0
        %401 = vmatpush1.msra.mxu0 0.0
        %402 = vmatprep.subr.mxu0 0.0
        %403 = vmatpush1.msra.mxu0 0.0
        %404 = vmatprep.subr.mxu0 0.0
        %405 = vmatpush1.msra.mxu0 0.0
        %406 = vmatprep.subr.mxu0 0.0
        %407 = vmatpush1.msra.mxu0 0.0
        %408 = vmatprep.subr.mxu0 0.0
        %409 = vmatpush1.msra.mxu0 0.0
        %410 = vmatprep.subr.mxu0 0.0
        %411 = vmatpush1.msra.mxu0 0.0
        %412 = vmatprep.subr.mxu0 0.0
        %413 = vmatpush1.msra.mxu0 0.0
        %414 = vmatprep.subr.mxu0 0.0
        %415 = vmatpush1.msra.mxu0 0.0
        %416 = vmatprep.subr.mxu0 0.0
        %417 = vmatpush1.msra.mxu0 0.0
        %418 = vmatprep.subr.mxu0 0.0
        %419 = vmatpush1.msra.mxu0 0.0
        %420 = vmatprep.subr.mxu0 0.0
        %421 = vmatpush1.msra.mxu0 0.0
        %422 = vmatprep.subr.mxu0 0.0
        %423 = vmatpush1.msra.mxu0 0.0
        %424 = vmatprep.subr.mxu0 0.0
        %425 = vmatpush1.msra.mxu0 0.0
        %426 = vmatprep.subr.mxu0 0.0
        %427 = vmatpush1.msra.mxu0 0.0
        %428 = vmatprep.subr.mxu0 0.0
        %429 = vmatpush1.msra.mxu0 0.0
        %430 = vmatprep.subr.mxu0 0.0
        %431 = vmatpush1.msra.mxu0 0.0
        %432 = vmatprep.subr.mxu0 0.0
        %433 = vmatpush1.msra.mxu0 0.0
        %434 = vmatprep.subr.mxu0 0.0
        %435 = vmatpush1.msra.mxu0 0.0
        %436 = vmatprep.subr.mxu0 0.0
        %437 = vmatpush1.msra.mxu0 0.0
        %438 = vmatprep.mubr.f32.mxu0 0.0
        %439 = vmatmul.mubr.f32.gmra.mrb[0].mxu0 %v218
        %v440 = vpop.f32.mrb[0].mxu0
        %v441 = vadd.f32 0.0, %v440
        %v442 = vpop.f32.mrb[0].mxu0
        %443 = vdwg.mxu0
        %s444 = scalar_lea.vmem %s208, 16 [#allocation7]
        %445 = vst.msk [vmem:[%s444] sm:$0xff] %vm290, %v441
        %s446 = scalar_lea.vmem [#allocation5], 96
        %v447 = vld [vmem:[%s446] sm:$0xff]
        %v448 = vld [vmem:[%s446 + $0x8] sm:$0xff]
        %v449 = vld [vmem:[%s446 + $0x10] sm:$0xff]
        %v450 = vld [vmem:[%s446 + $0x18] sm:$0xff]
        %451 = vmatprep.subr.mxu0 0.0
        %452 = vmatpush1.msra.mxu0 %v447
        %453 = vmatprep.subr.mxu0 0.0
        %454 = vmatpush1.msra.mxu0 %v448
        %455 = vmatprep.subr.mxu0 0.0
        %456 = vmatpush1.msra.mxu0 %v449
        %457 = vmatprep.subr.mxu0 0.0
        %458 = vmatpush1.msra.mxu0 %v450
        %459 = vmatprep.subr.mxu0 0.0
        %460 = vmatpush1.msra.mxu0 0.0
        %461 = vmatprep.subr.mxu0 0.0
        %462 = vmatpush1.msra.mxu0 0.0
        %463 = vmatprep.subr.mxu0 0.0
        %464 = vmatpush1.msra.mxu0 0.0
        %465 = vmatprep.subr.mxu0 0.0
        %466 = vmatpush1.msra.mxu0 0.0
        %467 = vmatprep.subr.mxu0 0.0
        %468 = vmatpush1.msra.mxu0 0.0
        %469 = vmatprep.subr.mxu0 0.0
        %470 = vmatpush1.msra.mxu0 0.0
        %471 = vmatprep.subr.mxu0 0.0
        %472 = vmatpush1.msra.mxu0 0.0
        %473 = vmatprep.subr.mxu0 0.0
        %474 = vmatpush1.msra.mxu0 0.0
        %475 = vmatprep.subr.mxu0 0.0
        %476 = vmatpush1.msra.mxu0 0.0
        %477 = vmatprep.subr.mxu0 0.0
        %478 = vmatpush1.msra.mxu0 0.0
        %479 = vmatprep.subr.mxu0 0.0
        %480 = vmatpush1.msra.mxu0 0.0
        %481 = vmatprep.subr.mxu0 0.0
        %482 = vmatpush1.msra.mxu0 0.0
        %483 = vmatprep.subr.mxu0 0.0
        %484 = vmatpush1.msra.mxu0 0.0
        %485 = vmatprep.subr.mxu0 0.0
        %486 = vmatpush1.msra.mxu0 0.0
        %487 = vmatprep.subr.mxu0 0.0
        %488 = vmatpush1.msra.mxu0 0.0
        %489 = vmatprep.subr.mxu0 0.0
        %490 = vmatpush1.msra.mxu0 0.0
        %491 = vmatprep.subr.mxu0 0.0
        %492 = vmatpush1.msra.mxu0 0.0
        %493 = vmatprep.subr.mxu0 0.0
        %494 = vmatpush1.msra.mxu0 0.0
        %495 = vmatprep.subr.mxu0 0.0
        %496 = vmatpush1.msra.mxu0 0.0
        %497 = vmatprep.subr.mxu0 0.0
        %498 = vmatpush1.msra.mxu0 0.0
        %499 = vmatprep.subr.mxu0 0.0
        %500 = vmatpush1.msra.mxu0 0.0
        %501 = vmatprep.subr.mxu0 0.0
        %502 = vmatpush1.msra.mxu0 0.0
        %503 = vmatprep.subr.mxu0 0.0
        %504 = vmatpush1.msra.mxu0 0.0
        %505 = vmatprep.subr.mxu0 0.0
        %506 = vmatpush1.msra.mxu0 0.0
        %507 = vmatprep.subr.mxu0 0.0
        %508 = vmatpush1.msra.mxu0 0.0
        %509 = vmatprep.subr.mxu0 0.0
        %510 = vmatpush1.msra.mxu0 0.0
        %511 = vmatprep.subr.mxu0 0.0
        %512 = vmatpush1.msra.mxu0 0.0
        %513 = vmatprep.subr.mxu0 0.0
        %514 = vmatpush1.msra.mxu0 0.0
        %515 = vmatprep.mubr.f32.mxu0 0.0
        %516 = vmatmul.mubr.f32.gmra.mrb[0].mxu0 %v218
        %v517 = vpop.f32.mrb[0].mxu0
        %v518 = vadd.f32 0.0, %v517
        %v519 = vpop.f32.mrb[0].mxu0
        %520 = vdwg.mxu0
        %s521 = scalar_lea.vmem %s208, 24 [#allocation7]
        %522 = vst.msk [vmem:[%s521] sm:$0xff] %vm290, %v518
        %s523 = sand.u32 %s105, 1
        %s524 = scalar_lea.sflag [#allocation4], %s523
        %s525 = sand.u32 %s105, 1
        %s526 = smul.addr %s525, 32
        %s527 = scalar_lea.vmem [#allocation7], %s526
        // Predicated region
        $region37: #{tpu_custom_call.1} parent=27 // pred_check
          %p528 = pneg %p115
        $region38: #{tpu_custom_call.1} parent=27 // pred_check_branch
          %530 = sbr.rel (%p528) target = $region40
        $region39: #{tpu_custom_call.1} parent=27 // pred_region
          %s531 = smul.u32 4, %s26
          %s533 = ssub.s32 512, 512
          %534 = vsyncadd %s524, %s533
          %s535 = sadd.s32 %s27, %s531
          %s536 = smul.addr %s25, 4
          %s537 = sadd.s32 %s535, %s536
          %s538 = smul.addr %s537, 128
          %s539 = scalar_lea.hbm %s2, %s538
          %s540 = sshll.u32 %s527, 4
          %s541 = int_to_ptr.vmem [resolvable:$true] %s540
          %546 = dma.vmem_to_hbm [thread:$0]  %s541, 512, %s539, %s524, 128, 128, 8
        $region40: #{tpu_custom_call.1} parent=27 // pred_fallthru
          _
      $region28: #{tpu_custom_call.1} parent=5 // pred_fallthru
        _
      %p547 = scmp.le.s32.totalorder 2, %s15
      // Predicated region
      $region41: #{tpu_custom_call.1} parent=5 // pred_check
        %p548 = pneg %p547
      $region42: #{tpu_custom_call.1} parent=5 // pred_check_branch
        %550 = sbr.rel (%p548) target = $region44
      $region43: #{tpu_custom_call.1} parent=5 // pred_region
        %s551 = ssub.s32 %s15, 2
        // Predicated region
        $region45: #{tpu_custom_call.1} parent=43 // pred_check
          %p552 = pneg %p121
        $region46: #{tpu_custom_call.1} parent=43 // pred_check_branch
          %554 = sbr.rel (%p552) target = $region48
        $region47: #{tpu_custom_call.1} parent=43 // pred_region
          %s555 = sand.u32 %s106, 1
          %s556 = scalar_lea.sflag [#allocation4], %s555
          %s557 = sand.u32 %s106, 1
          %s558 = smul.addr %s557, 32
          %s559 = scalar_lea.vmem [#allocation7], %s558
          %560 = dma.done %s556, 512
        $region48: #{tpu_custom_call.1} parent=43 // pred_fallthru
          _
      $region44: #{tpu_custom_call.1} parent=5 // pred_fallthru
        _
    $region6: #{tpu_custom_call.1} parent=1 // loop_footer
      %s19 = sadd.s32 1, %s15
    $region7: #{tpu_custom_call.1} parent=1 // loop_footer_branch
      %14 = sbr.rel target = $region3
    $region8: #{tpu_custom_call.1} parent=1 // loop_exit
      _
    %561 = vsyncpa [#allocation3], 1
    %s562 = scalar_lea.sflag [#allocation3], 1
    %563 = vsyncpa %s562, 1
    %564 = vsyncpa [#allocation6], 1
    %565 = vsyncpa [#allocation4], 1
    %s566 = scalar_lea.sflag [#allocation4], 1
    %567 = vsyncpa %s566, 1

</llo_original>
